<compile_context>
chip_gen: v6e
topology: v6e:2x2x1
jax: 0.10.0
libtpu: 0.0.40
codegen_flags: <defaults>
</compile_context>

<pallas_src>
import jax
import jax.numpy as jnp
from jax.experimental import pallas as pl
from jax.experimental.pallas import tpu as pltpu


_LANE = 128


def _scoped_vmem_bytes():
    """Half of physical VMEM (64 MiB on v5e/v6e, 32 MiB on v7x)."""
    phys = 64 * 1024 * 1024
    try:
        info = pltpu.get_tpu_info()
        val = int(getattr(info, "vmem_capacity_bytes", 0) or 0)
        if val >= 16 * 1024 * 1024:
            phys = val
    except Exception:
        pass
    return phys // 2


def _pick_tile_b(B, C, pp_itemsize, tile_budget_bytes):
    """Rows per grid step, sized by (padded) VMEM bytes, not a row cap."""
    c_pad = -(-C // _LANE) * _LANE
    row_bytes = c_pad * pp_itemsize      # policy_pred tile, lane-padded layout
    row_bytes += _LANE * 4               # (tile_b, 1) int32 targets, lane-padded
    row_bytes += 2 * 8 * 4               # value_pred/value blocks, sublane-padded
    rows = tile_budget_bytes // (2 * row_bytes)   # x2: double-buffered pipeline
    if rows >= B:
        return B
    if rows >= _LANE:
        rows = (rows // _LANE) * _LANE
    else:
        rows = max(8, (rows // 8) * 8)
    return int(min(rows, B))


def loss_fn(policy_pred, policy, value_pred, value, *, tile_b=None, num_splits=None):
    """policy_pred: (B, C) probabilities; policy: (B,) int class ids;
       value_pred/value: (B,) reals.  Returns (policy_loss, value_loss)."""
    B, C = policy_pred.shape
    pp_itemsize = jnp.dtype(policy_pred.dtype).itemsize

    scoped_vmem = _scoped_vmem_bytes()
    tile_budget = scoped_vmem * 3 // 4
    if tile_b is None:
        tile_b = _pick_tile_b(B, C, pp_itemsize, tile_budget)
    if tile_b >= B:
        tile_b = B                              # single full-extent block
    else:
        tile_b = max(8, (tile_b // 8) * 8)      # legal sublane block

    num_tiles = -(-B // tile_b)

    # Leading "parallel" axis: splits the batch stream across v7x's two
    # TensorCores; serial (and cheap) on single-core v5e/v6e.
    if num_splits is None:
        num_splits = 2 if num_tiles >= 2 else 1
    num_splits = max(1, min(int(num_splits), num_tiles))

    T = -(-num_tiles // num_splits)             # tiles per split
    total_blocks = num_splits * T               # >= num_tiles (extras fully masked)
    needs_mask = (num_tiles * tile_b != B) or (total_blocks != num_tiles)
    inv_b = 1.0 / float(B)

    # ---- wrapper-side layout plumbing (all tiny / free reshapes) ----------
    pol2d = policy.astype(jnp.int32).reshape(B, 1)

    total_rows = total_blocks * tile_b
    vp_flat = value_pred.reshape(-1)
    v_flat = value.reshape(-1)
    pad = total_rows - B
    if pad:
        vp_flat = jnp.concatenate([vp_flat, jnp.zeros((pad,), vp_flat.dtype)])
        v_flat = jnp.concatenate([v_flat, jnp.zeros((pad,), v_flat.dtype)])
    vp_blk = vp_flat.reshape(total_blocks, 1, tile_b)
    v_blk = v_flat.reshape(total_blocks, 1, tile_b)

    if total_blocks == num_tiles:
        pol_map = lambda s, t: (s * T + t, 0)
    else:  # clamp possibly-OOB trailing block; its rows are masked in-kernel
        pol_map = lambda s, t: (jnp.minimum(s * T + t, num_tiles - 1), 0)
    val_map = lambda s, t: (s * T + t, 0, 0)
    out_map = lambda s, t: (s, 0)

    def kernel(pp_ref, pol_ref, vp_ref, v_ref, nll_ref, sse_ref, acc_ref):
        s = pl.program_id(0)
        t = pl.program_id(1)
        g = s * T + t                       # global tile id (may exceed num_tiles-1)

        @pl.when(t == 0)
        def _init():
            acc_ref[0] = jnp.float32(0.0)   # sum of target log-probs
            acc_ref[1] = jnp.float32(0.0)   # sum of squared value errors

        # ---- value MSE folded into the tiled stream ----------------------
        # Padded rows are zeros in both arrays -> zero contribution, no mask.
        vd = vp_ref[...].astype(jnp.float32) - v_ref[...].astype(jnp.float32)
        acc_ref[1] = acc_ref[1] + jnp.sum(vd * vd)

        # ---- policy NLL partial: select-then-log --------------------------
        pp = pp_ref[...]                                   # (tile_b, C) native
        tgt = pol_ref[...]                                 # (tile_b, 1) int32
        col = jax.lax.broadcasted_iota(jnp.int32, pp.shape, 1)
        sel = jnp.where(col == tgt, pp, jnp.zeros_like(pp))
        # exactly one nonzero per row -> sum is an exact gather
        picked_p = jnp.sum(sel, axis=1, keepdims=True).astype(jnp.float32)

        if needs_mask:
            is_tail = g >= num_tiles - 1    # only tail blocks contain invalid rows

            @pl.when(jnp.logical_not(is_tail))
            def _steady():                  # no mask math in steady state
                acc_ref[0] = acc_ref[0] + jnp.sum(jnp.log(picked_p))

            @pl.when(is_tail)
            def _tail():
                row = jax.lax.broadcasted_iota(jnp.int32, (tile_b, 1), 0) + g * tile_b
                valid = row < B
                lp = jnp.where(valid,
                               jnp.log(jnp.where(valid, picked_p, 1.0)),
                               0.0)
                acc_ref[0] = acc_ref[0] + jnp.sum(lp)
        else:
            acc_ref[0] = acc_ref[0] + jnp.sum(jnp.log(picked_p))

        @pl.when(t == T - 1)
        def _fin():
            nll_ref[0, 0] = acc_ref[0]
            sse_ref[0, 0] = acc_ref[1]

    cost = pl.CostEstimate(
        flops=int(3 * B * C + 6 * B),
        transcendentals=int(B),
        bytes_accessed=int(B * C * pp_itemsize + B * 4
                           + B * (jnp.dtype(value_pred.dtype).itemsize
                                  + jnp.dtype(value.dtype).itemsize)
                           + 8 * num_splits),
    )

    nll, sse = pl.pallas_call(
        kernel,
        out_shape=(
            jax.ShapeDtypeStruct((num_splits, 1), jnp.float32),   # per-split log-prob sums
            jax.ShapeDtypeStruct((num_splits, 1), jnp.float32),   # per-split squared-error sums
        ),
        grid_spec=pltpu.PrefetchScalarGridSpec(
            num_scalar_prefetch=0,
            grid=(num_splits, T),
            in_specs=[
                pl.BlockSpec((tile_b, C), pol_map),      # policy_pred tile
                pl.BlockSpec((tile_b, 1), pol_map),      # int32 targets
                pl.BlockSpec((1, 1, tile_b), val_map),   # value_pred tile (lane-dense)
                pl.BlockSpec((1, 1, tile_b), val_map),   # value tile (lane-dense)
            ],
            out_specs=(
                pl.BlockSpec((1, 1), out_map, memory_space=pltpu.SMEM),
                pl.BlockSpec((1, 1), out_map, memory_space=pltpu.SMEM),
            ),
            scratch_shapes=[pltpu.SMEM((2,), jnp.float32)],
        ),
        compiler_params=pltpu.CompilerParams(
            dimension_semantics=("parallel", "arbitrary"),
            vmem_limit_bytes=int(scoped_vmem),
        ),
        cost_estimate=cost,
    )(policy_pred, pol2d, vp_blk, v_blk)

    policy_loss = -(jnp.sum(nll) * inv_b)
    value_loss = jnp.sum(sse) * inv_b
    return policy_loss, value_loss


if __name__ == "__main__":
    key = jax.random.PRNGKey(0)
    k1, k2, k3, k4 = jax.random.split(key, 4)

    # ---- test 1: f32, single full-extent tile ------------------------------
    B, C = 8, 16
    logits = jax.random.normal(k1, (B, C), dtype=jnp.float32)
    policy_pred = jax.nn.softmax(logits, axis=-1)
    policy = jax.random.randint(k2, (B,), 0, C, dtype=jnp.int32)
    value_pred = jax.random.normal(k3, (B,), dtype=jnp.float32)
    value = jax.random.normal(k4, (B,), dtype=jnp.float32)

    ploss, vloss = loss_fn(policy_pred, policy, value_pred, value)
    jax.block_until_ready((ploss, vloss))

    ploss_ref = -jnp.mean(jnp.log(policy_pred)[jnp.arange(B), policy])
    vloss_ref = jnp.mean((value_pred - value) ** 2)
    assert jnp.allclose(ploss, ploss_ref, atol=1e-5), (ploss, ploss_ref)
    assert jnp.allclose(vloss, vloss_ref, atol=1e-5), (vloss, vloss_ref)

    # ---- test 2: bf16 inputs, 2-split grid, masked tail + fully-OOB block --
    B2, C2 = 20, 16
    logits2 = jax.random.normal(k1, (B2, C2), dtype=jnp.float32)
    pp2 = jax.nn.softmax(logits2, axis=-1).astype(jnp.bfloat16)
    pol2 = jax.random.randint(k2, (B2,), 0, C2, dtype=jnp.int32)
    vp2 = jax.random.normal(k3, (B2,), dtype=jnp.bfloat16)
    v2 = jax.random.normal(k4, (B2,), dtype=jnp.float32)

    # grid = (2 splits, 2 tiles/split); num_tiles=3 -> one partial tile and
    # one fully out-of-range (clamped + masked) tile are exercised.
    p2, vl2 = loss_fn(pp2, pol2, vp2, v2, tile_b=8, num_splits=2)
    jax.block_until_ready((p2, vl2))

    lp2_ref = jnp.log(pp2.astype(jnp.float32))
    p2_ref = -jnp.mean(lp2_ref[jnp.arange(B2), pol2])
    vl2_ref = jnp.mean((vp2.astype(jnp.float32) - v2) ** 2)
    assert jnp.allclose(p2, p2_ref, atol=1e-4), (p2, p2_ref)
    assert jnp.allclose(vl2, vl2_ref, atol=1e-4), (vl2, vl2_ref)

    print("KERNEL_OK")
</pallas_src>

<mosaic_0001>
module attributes {stable_mosaic.version = 11 : i64} {
  func.func @kernel(%arg0: i32, %arg1: i32, %arg2: memref<8x16xf32, #tpu.memory_space<vmem>>, %arg3: memref<8x1xi32, #tpu.memory_space<vmem>>, %arg4: memref<1x1x8xf32, #tpu.memory_space<vmem>>, %arg5: memref<1x1x8xf32, #tpu.memory_space<vmem>>, %arg6: memref<1x1xf32, #tpu.memory_space<smem>>, %arg7: memref<1x1xf32, #tpu.memory_space<smem>>, %arg8: memref<2xf32, #tpu.memory_space<smem>>) attributes {dimension_semantics = [#tpu.dimension_semantics<parallel>, #tpu.dimension_semantics<arbitrary>], iteration_bounds = array<i64: 1, 1>, scalar_prefetch = 0 : i64, scratch_operands = 1 : i64, tpu.core_type = #tpu.core_type<tc>, window_params = [{transform_indices = @transform_0, window_bounds = array<i64: 8, 16>}, {transform_indices = @transform_1, window_bounds = array<i64: 8, 1>}, {transform_indices = @transform_2, window_bounds = array<i64: 1, 1, 8>}, {transform_indices = @transform_3, window_bounds = array<i64: 1, 1, 8>}, {transform_indices = @transform_4, window_bounds = array<i64: 1, 1>}, {transform_indices = @transform_5, window_bounds = array<i64: 1, 1>}]} {
    %c0_i32 = arith.constant 0 : i32
    %0 = arith.cmpi eq, %arg1, %c0_i32 : i32
    %1 = arith.extui %0 : i1 to i32
    %c0_i32_0 = arith.constant 0 : i32
    %2 = arith.cmpi ne, %1, %c0_i32_0 : i32
    scf.if %2 {
      %cst_18 = arith.constant 0.000000e+00 : f32
      %c0_19 = arith.constant 0 : index
      %34 = memref.load %arg8[%c0_19] : memref<2xf32, #tpu.memory_space<smem>>
      memref.store %cst_18, %arg8[%c0_19] : memref<2xf32, #tpu.memory_space<smem>>
      %cst_20 = arith.constant 0.000000e+00 : f32
      %c1_21 = arith.constant 1 : index
      %35 = memref.load %arg8[%c1_21] : memref<2xf32, #tpu.memory_space<smem>>
      memref.store %cst_20, %arg8[%c1_21] : memref<2xf32, #tpu.memory_space<smem>>
    } else {
    }
    %c0 = arith.constant 0 : index
    %c0_1 = arith.constant 0 : index
    %c0_2 = arith.constant 0 : index
    %3 = vector.load %arg4[%c0, %c0_1, %c0_2] : memref<1x1x8xf32, #tpu.memory_space<vmem>>, vector<1x1x8xf32>
    %c0_3 = arith.constant 0 : index
    %c0_4 = arith.constant 0 : index
    %c0_5 = arith.constant 0 : index
    %4 = vector.load %arg5[%c0_3, %c0_4, %c0_5] : memref<1x1x8xf32, #tpu.memory_space<vmem>>, vector<1x1x8xf32>
    %5 = arith.subf %3, %4 : vector<1x1x8xf32>
    %c1 = arith.constant 1 : index
    %6 = memref.load %arg8[%c1] : memref<2xf32, #tpu.memory_space<smem>>
    %7 = arith.mulf %5, %5 : vector<1x1x8xf32>
    %8 = vector.shape_cast %7 : vector<1x1x8xf32> to vector<1x1x1x8xf32>
    %cst = arith.constant dense<0.000000e+00> : vector<1xf32>
    %9 = vector.multi_reduction <add>, %8, %cst [1, 2, 3] : vector<1x1x1x8xf32> to vector<1xf32>
    %10 = vector.shape_cast %9 : vector<1xf32> to vector<1x1x1x1xf32>
    %11 = vector.extract %10[0, 0, 0, 0] : f32 from vector<1x1x1x1xf32>
    %12 = arith.addf %6, %11 : f32
    %c1_6 = arith.constant 1 : index
    %13 = memref.load %arg8[%c1_6] : memref<2xf32, #tpu.memory_space<smem>>
    memref.store %12, %arg8[%c1_6] : memref<2xf32, #tpu.memory_space<smem>>
    %c0_7 = arith.constant 0 : index
    %c0_8 = arith.constant 0 : index
    %14 = vector.load %arg2[%c0_7, %c0_8] : memref<8x16xf32, #tpu.memory_space<vmem>>, vector<8x16xf32>
    %c0_9 = arith.constant 0 : index
    %c0_10 = arith.constant 0 : index
    %15 = vector.load %arg3[%c0_9, %c0_10] : memref<8x1xi32, #tpu.memory_space<vmem>>, vector<8x1xi32>
    %16 = tpu.iota {dimensions = array<i32: 1>} : vector<8x16xi32>
    %17 = vector.broadcast %15 : vector<8x1xi32> to vector<8x16xi32>
    %18 = arith.cmpi eq, %16, %17 : vector<8x16xi32>
    %cst_11 = arith.constant 0.000000e+00 : f32
    %19 = vector.broadcast %cst_11 : f32 to vector<8x16xf32>
    %20 = arith.select %18, %14, %19 : vector<8x16xi1>, vector<8x16xf32>
    %cst_12 = arith.constant dense<0.000000e+00> : vector<8xf32>
    %21 = vector.multi_reduction <add>, %20, %cst_12 [1] : vector<8x16xf32> to vector<8xf32>
    %22 = vector.shape_cast %21 : vector<8xf32> to vector<8x1xf32>
    %c0_13 = arith.constant 0 : index
    %23 = memref.load %arg8[%c0_13] : memref<2xf32, #tpu.memory_space<smem>>
    %24 = math.log %22 : vector<8x1xf32>
    %25 = vector.shape_cast %24 : vector<8x1xf32> to vector<1x8x1xf32>
    %cst_14 = arith.constant dense<0.000000e+00> : vector<1xf32>
    %26 = vector.multi_reduction <add>, %25, %cst_14 [1, 2] : vector<1x8x1xf32> to vector<1xf32>
    %27 = vector.shape_cast %26 : vector<1xf32> to vector<1x1x1xf32>
    %28 = vector.extract %27[0, 0, 0] : f32 from vector<1x1x1xf32>
    %29 = arith.addf %23, %28 : f32
    %c0_15 = arith.constant 0 : index
    %30 = memref.load %arg8[%c0_15] : memref<2xf32, #tpu.memory_space<smem>>
    memref.store %29, %arg8[%c0_15] : memref<2xf32, #tpu.memory_space<smem>>
    %c0_i32_16 = arith.constant 0 : i32
    %31 = arith.cmpi eq, %arg1, %c0_i32_16 : i32
    %32 = arith.extui %31 : i1 to i32
    %c0_i32_17 = arith.constant 0 : i32
    %33 = arith.cmpi ne, %32, %c0_i32_17 : i32
    scf.if %33 {
      %c0_18 = arith.constant 0 : index
      %34 = memref.load %arg8[%c0_18] : memref<2xf32, #tpu.memory_space<smem>>
      %c0_19 = arith.constant 0 : index
      %c0_20 = arith.constant 0 : index
      %35 = memref.load %arg6[%c0_19, %c0_20] : memref<1x1xf32, #tpu.memory_space<smem>>
      memref.store %34, %arg6[%c0_19, %c0_20] : memref<1x1xf32, #tpu.memory_space<smem>>
      %c1_21 = arith.constant 1 : index
      %36 = memref.load %arg8[%c1_21] : memref<2xf32, #tpu.memory_space<smem>>
      %c0_22 = arith.constant 0 : index
      %c0_23 = arith.constant 0 : index
      %37 = memref.load %arg7[%c0_22, %c0_23] : memref<1x1xf32, #tpu.memory_space<smem>>
      memref.store %36, %arg7[%c0_22, %c0_23] : memref<1x1xf32, #tpu.memory_space<smem>>
    } else {
    }
    return
  }
  func.func @transform_0(%arg0: i32, %arg1: i32) -> (i32, i32) {
    %c1_i32 = arith.constant 1 : i32
    %0 = arith.muli %arg0, %c1_i32 : i32
    %1 = arith.addi %0, %arg1 : i32
    %c0_i32 = arith.constant 0 : i32
    %c0_i32_0 = arith.constant 0 : i32
    return %1, %c0_i32 : i32, i32
  }
  func.func @transform_1(%arg0: i32, %arg1: i32) -> (i32, i32) {
    %c1_i32 = arith.constant 1 : i32
    %0 = arith.muli %arg0, %c1_i32 : i32
    %1 = arith.addi %0, %arg1 : i32
    %c0_i32 = arith.constant 0 : i32
    %c0_i32_0 = arith.constant 0 : i32
    return %1, %c0_i32 : i32, i32
  }
  func.func @transform_2(%arg0: i32, %arg1: i32) -> (i32, i32, i32) {
    %c1_i32 = arith.constant 1 : i32
    %0 = arith.muli %arg0, %c1_i32 : i32
    %1 = arith.addi %0, %arg1 : i32
    %c0_i32 = arith.constant 0 : i32
    %c0_i32_0 = arith.constant 0 : i32
    %c0_i32_1 = arith.constant 0 : i32
    return %1, %c0_i32, %c0_i32_0 : i32, i32, i32
  }
  func.func @transform_3(%arg0: i32, %arg1: i32) -> (i32, i32, i32) {
    %c1_i32 = arith.constant 1 : i32
    %0 = arith.muli %arg0, %c1_i32 : i32
    %1 = arith.addi %0, %arg1 : i32
    %c0_i32 = arith.constant 0 : i32
    %c0_i32_0 = arith.constant 0 : i32
    %c0_i32_1 = arith.constant 0 : i32
    return %1, %c0_i32, %c0_i32_0 : i32, i32, i32
  }
  func.func @transform_4(%arg0: i32, %arg1: i32) -> (i32, i32) {
    %c0_i32 = arith.constant 0 : i32
    %c0_i32_0 = arith.constant 0 : i32
    return %arg0, %c0_i32 : i32, i32
  }
  func.func @transform_5(%arg0: i32, %arg1: i32) -> (i32, i32) {
    %c0_i32 = arith.constant 0 : i32
    %c0_i32_0 = arith.constant 0 : i32
    return %arg0, %c0_i32 : i32, i32
  }
}

</mosaic_0001>

<llo_original>
// kernel: tpu_custom_call.1
$region0: #{tpu_custom_call.1}
  #allocation0 [shape = 'u32[]', space=smem, size = 0x4, offset = 0x4, fixed_abs, tag = 'smem constant byte address 0x4 - core index']
  #allocation1 [shape = 'u32[144,128]{1,0:T(1,128)}', space=vmem, size = 0x12000, scoped, tag = 'internal scratch']
  #allocation2 [shape = 'f32[2]{0:T(128)}', space=smem, size = 0x200, scoped, tag = 'scratch operand']
  %s0 = inlined_call_operand.vmem [shape: f32[8,16], index: 0, kind: input, shape index: {}]
  %s1 = inlined_call_operand.vmem [shape: s32[8,1], index: 1, kind: input, shape index: {}]
  %s2 = inlined_call_operand.vmem [shape: f32[1,1,8], index: 2, kind: input, shape index: {}]
  %s3 = inlined_call_operand.vmem [shape: f32[1,1,8], index: 3, kind: input, shape index: {}]
  %s4 = inlined_call_operand.hbm [shape: f32[1,1], index: 4, kind: output, shape index: {0}]
  %s5 = inlined_call_operand.hbm [shape: f32[1,1], index: 5, kind: output, shape index: {1}]
  %6 = xla_tuple %s4, %s5
  %s7 = sld [smem:[#allocation0]]
  $region42: #{tpu_custom_call.1} parent=0
    _
  %s9 = ssub.s32 1, %s7
  %s10 = scalar_select 0, %s9, %s7
  $region1: #{tpu_custom_call.1} parent=0
    #allocation3 [shape = 'u8[512]{0}', space=smem, size = 0x200, scoped, tag = 'output window, operand 0, single buffered']
    #allocation4 [shape = 's32[1]{0}', space=sflag, size = 0x4, scoped, tag = 'scoped memory for tpu_custom_call.1']
    #allocation5 [shape = 'u8[512]{0}', space=smem, size = 0x200, scoped, tag = 'output window, operand 1, single buffered']
    #allocation6 [shape = 's32[1]{0}', space=sflag, size = 0x4, scoped, tag = 'scoped memory for tpu_custom_call.1']
    %11 = vsyncpa [#allocation4], 0
    %12 = vsyncpa [#allocation6], 0
    // Predicated region
    $region2: #{tpu_custom_call.1} parent=1 // pred_check
      _
    $region3: #{tpu_custom_call.1} parent=1 // pred_check_branch
      %14 = sbr.rel (0) target = $region5
    $region4: #{tpu_custom_call.1} parent=1 // pred_region
      %s15 = sadd.s32 0, 0
      %p16 = scmp.lt.s32.totalorder %s15, 0
      %s17 = scalar_select %p16, %s15, 0
      %s18 = smul.addr %s17, 8
      %s19 = scalar_lea.vmem %s0, %s18
      %s20 = sadd.s32 0, 0
    $region5: #{tpu_custom_call.1} parent=1 // pred_fallthru
      _
    // Predicated region
    $region6: #{tpu_custom_call.1} parent=1 // pred_check
      _
    $region7: #{tpu_custom_call.1} parent=1 // pred_check_branch
      %22 = sbr.rel (0) target = $region9
    $region8: #{tpu_custom_call.1} parent=1 // pred_region
      %s23 = sadd.s32 0, 0
      %p24 = scmp.lt.s32.totalorder %s23, 0
      %s25 = scalar_select %p24, %s23, 0
      %s26 = smul.addr %s25, 8
      %s27 = scalar_lea.vmem %s1, %s26
      %s28 = sadd.s32 0, 0
    $region9: #{tpu_custom_call.1} parent=1 // pred_fallthru
      _
    // Predicated region
    $region10: #{tpu_custom_call.1} parent=1 // pred_check
      _
    $region11: #{tpu_custom_call.1} parent=1 // pred_check_branch
      %30 = sbr.rel (0) target = $region13
    $region12: #{tpu_custom_call.1} parent=1 // pred_region
      %s31 = sadd.s32 0, 0
      %p32 = scmp.lt.s32.totalorder %s31, 0
      %s33 = scalar_select %p32, %s31, 0
      %s34 = scalar_lea.vmem %s2, %s33
      %s35 = sadd.s32 0, 0
    $region13: #{tpu_custom_call.1} parent=1 // pred_fallthru
      _
    // Predicated region
    $region14: #{tpu_custom_call.1} parent=1 // pred_check
      _
    $region15: #{tpu_custom_call.1} parent=1 // pred_check_branch
      %37 = sbr.rel (0) target = $region17
    $region16: #{tpu_custom_call.1} parent=1 // pred_region
      %s38 = sadd.s32 0, 0
      %p39 = scmp.lt.s32.totalorder %s38, 0
      %s40 = scalar_select %p39, %s38, 0
      %s41 = scalar_lea.vmem %s3, %s40
      %s42 = sadd.s32 0, 0
    $region17: #{tpu_custom_call.1} parent=1 // pred_fallthru
      _
    %s43 = sadd.s32 0, 0
    %p44 = scmp.lt.s32.totalorder %s43, 0
    %s45 = scalar_select %p44, %s43, 0
    %s46 = smul.addr %s45, 8
    %s47 = scalar_lea.vmem %s0, %s46
    %s48 = sadd.s32 0, 0
    %p49 = scmp.lt.s32.totalorder %s48, 0
    %s50 = scalar_select %p49, %s48, 0
    %s51 = smul.addr %s50, 8
    %s52 = scalar_lea.vmem %s1, %s51
    %s53 = sadd.s32 0, 0
    %p54 = scmp.lt.s32.totalorder %s53, 0
    %s55 = scalar_select %p54, %s53, 0
    %s56 = scalar_lea.vmem %s2, %s55
    %s57 = sadd.s32 0, 0
    %p58 = scmp.lt.s32.totalorder %s57, 0
    %s59 = scalar_select %p58, %s57, 0
    %s60 = scalar_lea.vmem %s3, %s59
    %s61 = sadd.s32 0, 0
    %p62 = scmp.lt.s32.totalorder %s61, 0
    %s63 = scalar_select %p62, %s61, 0
    %s64 = smul.addr %s63, 8
    %s65 = scalar_lea.vmem %s0, %s64
    %s66 = sadd.s32 0, 0
    %s67 = sadd.s32 0, 0
    %p68 = scmp.lt.s32.totalorder %s67, 0
    %s69 = scalar_select %p68, %s67, 0
    %s70 = smul.addr %s69, 8
    %s71 = scalar_lea.vmem %s1, %s70
    %s72 = sadd.s32 0, 0
    %s73 = sadd.s32 0, 0
    %p74 = scmp.lt.s32.totalorder %s73, 0
    %s75 = scalar_select %p74, %s73, 0
    %s76 = scalar_lea.vmem %s2, %s75
    %s77 = sadd.s32 0, 0
    %s78 = sadd.s32 0, 0
    %p79 = scmp.lt.s32.totalorder %s78, 0
    %s80 = scalar_select %p79, %s78, 0
    %s81 = scalar_lea.vmem %s3, %s80
    %s82 = sadd.s32 0, 0
    %p83 = scmp.eq.s32.totalorder 0, 0
    // Predicated region
    $region18: #{tpu_custom_call.1} parent=1 // pred_check
      %p84 = pneg %p83
    $region19: #{tpu_custom_call.1} parent=1 // pred_check_branch
      %86 = sbr.rel (%p84) target = $region21
    $region20: #{tpu_custom_call.1} parent=1 // pred_region
      %s87 = scalar_lea.smem [#allocation2], 0
      %88 = sst [smem:[%s87]] 0.0
      %s89 = scalar_lea.smem [#allocation2], 1
      %90 = sst [smem:[%s89]] 0.0
    $region21: #{tpu_custom_call.1} parent=1 // pred_fallthru
      _
    %v91 = vld [vmem:[%s76] sm:$0x1]
    %v92 = vld [vmem:[%s81] sm:$0x1]
    %v93 = vsub.f32 %v91, %v92
    %s94 = sld [smem:[#allocation2 + $0x1]]
    %v95 = vmul.f32 %v93, %v93
    %vm96 = vcmask 57344
    %v97 = vsel %vm96, %v95, 0.0
    %98 = vadd.xlane.f32.xlu0 %v97
    %v99 = vpop.xlane.xlu0 %98
    %v100 = vrot.slane %v99, 4
    %v101 = vadd.f32 %v99, %v100
    %v102 = vrot.slane %v101, 2
    %v103 = vadd.f32 %v101, %v102
    %v104 = vrot.slane %v103, 1
    %v105 = vadd.f32 %v103, %v104
    %s106 = vtos %v105
    %s107 = sadd.f32 %s94, %s106
    %s108 = scalar_lea.smem [#allocation2], 1
    %109 = sst [smem:[%s108]] %s107
    %v110 = vld [vmem:[%s65] sm:$0xff]
    %v111 = vld [vmem:[%s71] sm:$0xff]
    %v112 = vlaneseq
    %v113 = vand.u32 %v112, 127
    %114 = vset.pattern.permute.xlu0 0
    %115 = vperm.xlu0 %114, %v111
    %v116 = vpop.permute.xlu0 %115
    %vm117 = vcmp.eq.s32.totalorder %v113, %v116
    %v118 = vsel %vm117, %v110, 0.0
    %vm119 = vcmask 130048
    %v120 = vsel %vm119, %v118, 0.0
    %121 = vadd.xlane.f32.xlu0 %v120
    %v122 = vpop.xlane.xlu0 %121
    %s123 = sld [smem:[#allocation2]]
    %v124 = vlog2.pop %v122
    %v125 = vmul.f32 %v124, 0.6931472
    %vm126 = vcmask 7168
    %v127 = vsel %vm126, %v125, 0.0
    %128 = vadd.xlane.f32.xlu0 %v127
    %v129 = vpop.xlane.xlu0 %128
    %v130 = vrot.slane %v129, 4
    %v131 = vadd.f32 %v129, %v130
    %v132 = vrot.slane %v131, 2
    %v133 = vadd.f32 %v131, %v132
    %v134 = vrot.slane %v133, 1
    %v135 = vadd.f32 %v133, %v134
    %s136 = vtos %v135
    %s137 = sadd.f32 %s123, %s136
    %s138 = scalar_lea.smem [#allocation2], 0
    %139 = sst [smem:[%s138]] %s137
    // Predicated region
    $region22: #{tpu_custom_call.1} parent=1 // pred_check
      %p140 = pneg %p83
    $region23: #{tpu_custom_call.1} parent=1 // pred_check_branch
      %142 = sbr.rel (%p140) target = $region25
    $region24: #{tpu_custom_call.1} parent=1 // pred_region
      %s143 = sld [smem:[#allocation2]]
      %s144 = scalar_lea.smem [#allocation3], 0
      %145 = sst [smem:[%s144]] %s143
      %s146 = sld [smem:[#allocation2 + $0x1]]
      %s147 = scalar_lea.smem [#allocation5], 0
      %148 = sst [smem:[%s147]] %s146
    $region25: #{tpu_custom_call.1} parent=1 // pred_fallthru
      _
    // Predicated region
    $region26: #{tpu_custom_call.1} parent=1 // pred_check
      _
    $region27: #{tpu_custom_call.1} parent=1 // pred_check_branch
      %150 = sbr.rel (0) target = $region29
    $region28: #{tpu_custom_call.1} parent=1 // pred_region
      %s152 = ssub.s32 16, 16
      %153 = vsyncadd [#allocation4], %s152
      %156 = dma.smem_to_hbm [#allocation3], 16, %s4, [#allocation4]
    $region29: #{tpu_custom_call.1} parent=1 // pred_fallthru
      _
    // Predicated region
    $region30: #{tpu_custom_call.1} parent=1 // pred_check
      _
    $region31: #{tpu_custom_call.1} parent=1 // pred_check_branch
      %158 = sbr.rel (0) target = $region33
    $region32: #{tpu_custom_call.1} parent=1 // pred_region
      %s160 = ssub.s32 16, 16
      %161 = vsyncadd [#allocation6], %s160
      %164 = dma.smem_to_hbm [#allocation5], 16, %s5, [#allocation6]
    $region33: #{tpu_custom_call.1} parent=1 // pred_fallthru
      _
    // Predicated region
    $region34: #{tpu_custom_call.1} parent=1 // pred_check
      _
    $region35: #{tpu_custom_call.1} parent=1 // pred_check_branch
      %166 = sbr.rel (0) target = $region37
    $region36: #{tpu_custom_call.1} parent=1 // pred_region
      %167 = dma.done [#allocation4], 16
    $region37: #{tpu_custom_call.1} parent=1 // pred_fallthru
      _
    // Predicated region
    $region38: #{tpu_custom_call.1} parent=1 // pred_check
      _
    $region39: #{tpu_custom_call.1} parent=1 // pred_check_branch
      %169 = sbr.rel (0) target = $region41
    $region40: #{tpu_custom_call.1} parent=1 // pred_region
      %170 = dma.done [#allocation6], 16
    $region41: #{tpu_custom_call.1} parent=1 // pred_fallthru
      _
    %171 = sfence
    %172 = vsyncpa [#allocation4], 1
    %173 = vsyncpa [#allocation6], 1

</llo_original>
